<compile_context>
chip_gen: v7x
topology: tpu7x:2x2x1
jax: 0.10.0
libtpu: 0.0.40
codegen_flags: <defaults>
</compile_context>

<pallas_src>
import math

import jax
import jax.numpy as jnp
from jax import lax
from jax.experimental import pallas as pl
from jax.experimental.pallas import tpu as pltpu

_INV_SQRT2 = 0.7071067811865476

_MIN_PALLAS_BATCH = 128                 # below this, plain XLA is faster
_VMEM_TILE_BUDGET = 20 * 1024 * 1024    # keep tiles well under v7x scoped VMEM
_VMEM_LIMIT_BYTES = 32 * 1024 * 1024


def _fc_gelu_kernel(x_ref, s_ref, w_ref, b_ref, o_ref):
    """out = GELU_exact((x @ w) * s + b).

    x: (tb, W)      CLS hidden states (bf16 or f32)
    s: (tb, 1)      per-row scale (CLS attention-mask value), f32
    w: (W, I_pad)   pre-transposed, lane-padded weight (bf16 or f32)
    b: (1, I_pad)   lane-padded bias, f32
    o: (tb, I_pad)
    """
    # MXU matmul with f32 accumulation; RHS already in canonical (K, N) layout.
    y = jnp.dot(x_ref[...], w_ref[...], preferred_element_type=jnp.float32)
    # Row scale is distributive over the contraction: s*(x@W) == (s*x)@W.
    y = y * s_ref[...] + b_ref[...]
    # Exact (erf-based) GELU, matching torch.nn.GELU() default, in f32.
    g = 0.5 * y * (1.0 + lax.erf(y * jnp.float32(_INV_SQRT2)))
    o_ref[...] = g.astype(o_ref.dtype)


def _tile_vmem_bytes(tb, W, I_pad, in_bytes, out_bytes):
    """Pipeline VMEM footprint of one batch tile (double-buffered blocks)."""
    return (2 * tb * W * in_bytes          # x
            + 2 * tb * 1 * 4               # row scale
            + 2 * W * I_pad * in_bytes     # resident weight
            + 2 * 1 * I_pad * 4            # bias
            + 2 * tb * I_pad * out_bytes)  # output


def _select_batch_tile(B, W, I_pad, in_bytes, out_bytes):
    """Pick a batch tile in {512, 256, 128} that fits the VMEM budget.

    Prefers an even number of grid steps (v7x dual-TC balance), then minimal
    batch padding, then the largest tile (fewer ~0.35us grid-step overheads).
    Returns None if even the smallest tile would blow the budget.
    """
    cands = [tb for tb in (512, 256, 128)
             if _tile_vmem_bytes(tb, W, I_pad, in_bytes, out_bytes)
             <= _VMEM_TILE_BUDGET]
    if not cands:
        return None
    # Don't grossly over-pad small batches with a huge tile.
    limited = [tb for tb in cands if tb <= max(128, 2 * B)] or cands

    def score(tb):
        n = -(-B // tb)
        pad = n * tb - B
        odd = 0 if (n % 2 == 0) else 1
        return (odd, pad, -tb)

    return min(limited, key=score)


def text_encoder_head(cls, fc_weight, fc_bias, *, row_scale=None,
                      compute_dtype=jnp.bfloat16):
    """Linear(word_dim -> item_dim) + exact GELU on the CLS hidden state.

    cls:       (B, word_dim)
    fc_weight: (item_dim, word_dim)   (PyTorch nn.Linear layout)
    fc_bias:   (item_dim,)
    row_scale: optional (B,) or (B, 1) per-row scale fused into the kernel
    returns    (B, item_dim) in fc_weight.dtype
    """
    B, W = cls.shape
    I = fc_weight.shape[0]
    out_dtype = fc_weight.dtype

    in_bytes = jnp.dtype(compute_dtype).itemsize
    out_bytes = jnp.dtype(out_dtype).itemsize
    I_pad = max(128, -(-I // 128) * 128)
    tb = (None if B < _MIN_PALLAS_BATCH
          else _select_batch_tile(B, W, I_pad, in_bytes, out_bytes))

    if tb is None:
        # Tiny batch (or a weight too large for a single resident block): a
        # single fused XLA expression beats pallas_call launch/DMA setup cost.
        # TODO(synk): a K-tiled Pallas variant would be needed for weights whose
        # resident block alone exceeds the VMEM budget; not required here.
        x = cls.astype(jnp.float32)
        if row_scale is not None:
            x = x * jnp.reshape(row_scale, (B, 1)).astype(jnp.float32)
        y = x @ fc_weight.T.astype(jnp.float32) + fc_bias.astype(jnp.float32)
        return jax.nn.gelu(y, approximate=False).astype(out_dtype)

    n_tiles = -(-B // tb)
    B_pad = n_tiles * tb

    x = cls.astype(compute_dtype)
    if row_scale is None:
        s = jnp.ones((B, 1), jnp.float32)
    else:
        s = jnp.reshape(row_scale, (B, 1)).astype(jnp.float32)
    if B_pad != B:
        x = jnp.pad(x, ((0, B_pad - B), (0, 0)))
        s = jnp.pad(s, ((0, B_pad - B), (0, 0)))

    # One-time wrapper-side transpose + lane pad of the constant weight:
    # K on sublanes, N padded to a multiple of 128 on lanes -> unmasked stores,
    # full MXU columns, and no per-tile transpose inside the kernel.
    w_t = jnp.zeros((W, I_pad), compute_dtype).at[:, :I].set(
        fc_weight.T.astype(compute_dtype))
    b_p = jnp.zeros((1, I_pad), jnp.float32).at[:, :I].set(
        fc_bias.astype(jnp.float32))

    out = pl.pallas_call(
        _fc_gelu_kernel,
        out_shape=jax.ShapeDtypeStruct((B_pad, I_pad), out_dtype),
        grid=(n_tiles,),
        in_specs=[
            pl.BlockSpec((tb, W), lambda i: (i, 0)),        # cls tile
            pl.BlockSpec((tb, 1), lambda i: (i, 0)),        # row scale tile
            pl.BlockSpec((W, I_pad), lambda i: (0, 0)),     # resident weight
            pl.BlockSpec((1, I_pad), lambda i: (0, 0)),     # resident bias
        ],
        out_specs=pl.BlockSpec((tb, I_pad), lambda i: (i, 0)),
        compiler_params=pltpu.CompilerParams(
            dimension_semantics=("parallel",),
            vmem_limit_bytes=_VMEM_LIMIT_BYTES,
        ),
    )(x, s, w_t, b_p)
    return out[:B, :I]


def text_encoder_forward(text, emb_table, fc_weight, fc_bias, *,
                         compute_dtype=jnp.bfloat16):
    """Mirrors Text_Encoder.forward semantics."""
    batch_size, total_words = text.shape
    num_words = total_words // 2
    # torch.narrow(text, 1, 0, n)[:, 0] and torch.narrow(text, 1, n, n)[:, 0]
    cls_ids = text[:, 0]
    cls_mask = text[:, num_words]

    # TODO(synk): the external `nlp_model` (pretrained transformer) has no clean
    # in-script equivalent; it is replaced by a deterministic embedding-lookup
    # stub for the CLS token. Only the CLS row is gathered (everything else is
    # dead downstream), the table is cast to the bf16 compute dtype before the
    # gather so only a bf16 (B, W) slab hits HBM, and the CLS attention-mask
    # multiply is fused into the Pallas kernel as a per-row scale.
    cls = jnp.take(emb_table.astype(compute_dtype), cls_ids, axis=0)
    row_scale = cls_mask.astype(jnp.float32)

    return text_encoder_head(cls, fc_weight, fc_bias, row_scale=row_scale,
                             compute_dtype=compute_dtype)


if __name__ == "__main__":
    # Small, module-consistent shapes.
    batch, num_words = 4, 8
    vocab = 64
    word_embedding_dim, item_embedding_dim = 32, 16

    key = jax.random.PRNGKey(0)
    k_ids, k_emb, k_w, k_b, k_big = jax.random.split(key, 5)

    # text = [ids | attention_mask]  -> shape (batch, 2*num_words), int32
    text_ids = jax.random.randint(k_ids, (batch, num_words), 0, vocab,
                                  dtype=jnp.int32)
    text_attmask = jnp.ones((batch, num_words), dtype=jnp.int32)
    text = jnp.concatenate([text_ids, text_attmask], axis=1)

    # Deterministic synthetic parameters (no checkpoint loading).
    emb_table = 0.02 * jax.random.normal(
        k_emb, (vocab, word_embedding_dim), jnp.float32)
    fc_weight = (1.0 / math.sqrt(word_embedding_dim)) * jax.random.normal(
        k_w, (item_embedding_dim, word_embedding_dim), jnp.float32)
    fc_bias = 0.01 * jax.random.normal(k_b, (item_embedding_dim,), jnp.float32)

    def ref_forward(t):
        nw = t.shape[1] // 2
        cls_ref = emb_table[t[:, 0]] * t[:, nw][:, None].astype(jnp.float32)
        return cls_ref, jax.nn.gelu(cls_ref @ fc_weight.T + fc_bias,
                                    approximate=False)

    # --- 1) Tiny batch: full forward takes the fused-XLA fallback path -----
    out_small = jax.block_until_ready(
        text_encoder_forward(text, emb_table, fc_weight, fc_bias))
    _, ref_small = ref_forward(text)
    assert out_small.shape == (batch, item_embedding_dim), out_small.shape
    assert jnp.allclose(out_small, ref_small, atol=1e-3, rtol=2e-2)

    # --- 2) Larger batch (not a tile multiple): Pallas tiled path with ------
    #        batch padding, bf16 compute, fused CLS-mask scale.
    big_B = 300
    big_ids = jax.random.randint(k_big, (big_B, num_words), 0, vocab,
                                 dtype=jnp.int32)
    # Make the CLS-position mask value non-trivial (some zeros).
    big_mask = jnp.ones((big_B, num_words), jnp.int32).at[:, 0].set(
        (jnp.arange(big_B) % 7 != 0).astype(jnp.int32))
    big_text = jnp.concatenate([big_ids, big_mask], axis=1)

    out_big = jax.block_until_ready(
        text_encoder_forward(big_text, emb_table, fc_weight, fc_bias))
    cls_big_ref, ref_big = ref_forward(big_text)
    assert out_big.shape == (big_B, item_embedding_dim), out_big.shape
    assert jnp.allclose(out_big, ref_big, atol=2e-3, rtol=3e-2)

    # --- 3) Same Pallas tiled path with f32 compute: tight numerics check ---
    out_f32 = jax.block_until_ready(
        text_encoder_head(cls_big_ref, fc_weight, fc_bias,
                          compute_dtype=jnp.float32))
    ref_f32 = jax.nn.gelu(cls_big_ref @ fc_weight.T + fc_bias,
                          approximate=False)
    assert out_f32.shape == (big_B, item_embedding_dim), out_f32.shape
    assert jnp.allclose(out_f32, ref_f32, atol=1e-5, rtol=1e-5)

    print("KERNEL_OK")
</pallas_src>

<mosaic_0001>
module attributes {stable_mosaic.version = 11 : i64} {
  func.func @_fc_gelu_kernel(%arg0: i32, %arg1: memref<256x32xbf16, #tpu.memory_space<vmem>>, %arg2: memref<256x1xf32, #tpu.memory_space<vmem>>, %arg3: memref<32x128xbf16, #tpu.memory_space<vmem>>, %arg4: memref<1x128xf32, #tpu.memory_space<vmem>>, %arg5: memref<256x128xf32, #tpu.memory_space<vmem>>) attributes {dimension_semantics = [#tpu.dimension_semantics<parallel>], iteration_bounds = array<i64: 2>, scalar_prefetch = 0 : i64, scratch_operands = 0 : i64, tpu.core_type = #tpu.core_type<tc>, window_params = [{transform_indices = @transform_0, window_bounds = array<i64: 256, 32>}, {transform_indices = @transform_1, window_bounds = array<i64: 256, 1>}, {pipeline_mode = #tpu.pipeline_mode<synchronous>, transform_indices = @transform_2, window_bounds = array<i64: 32, 128>}, {pipeline_mode = #tpu.pipeline_mode<synchronous>, transform_indices = @transform_3, window_bounds = array<i64: 1, 128>}, {transform_indices = @transform_4, window_bounds = array<i64: 256, 128>}]} {
    %c0 = arith.constant 0 : index
    %c0_0 = arith.constant 0 : index
    %0 = vector.load %arg1[%c0, %c0_0] : memref<256x32xbf16, #tpu.memory_space<vmem>>, vector<256x32xbf16>
    %c0_1 = arith.constant 0 : index
    %c0_2 = arith.constant 0 : index
    %1 = vector.load %arg3[%c0_1, %c0_2] : memref<32x128xbf16, #tpu.memory_space<vmem>>, vector<32x128xbf16>
    %cst = arith.constant dense<0.000000e+00> : vector<256x128xf32>
    %2 = tpu.matmul %0, %1, %cst {dimension_numbers = #tpu.dot_dimension_numbers<[1], [0], [0], [1], [0, 0, 1, 1], [], []>} : vector<256x32xbf16>, vector<32x128xbf16>, vector<256x128xf32> -> vector<256x128xf32>
    %c0_3 = arith.constant 0 : index
    %c0_4 = arith.constant 0 : index
    %3 = vector.load %arg2[%c0_3, %c0_4] : memref<256x1xf32, #tpu.memory_space<vmem>>, vector<256x1xf32>
    %4 = vector.broadcast %3 : vector<256x1xf32> to vector<256x128xf32>
    %5 = arith.mulf %2, %4 : vector<256x128xf32>
    %c0_5 = arith.constant 0 : index
    %c0_6 = arith.constant 0 : index
    %6 = vector.load %arg4[%c0_5, %c0_6] : memref<1x128xf32, #tpu.memory_space<vmem>>, vector<1x128xf32>
    %7 = vector.broadcast %6 : vector<1x128xf32> to vector<256x128xf32>
    %8 = arith.addf %5, %7 : vector<256x128xf32>
    %cst_7 = arith.constant 5.000000e-01 : f32
    %9 = vector.broadcast %cst_7 : f32 to vector<256x128xf32>
    %10 = arith.mulf %9, %8 : vector<256x128xf32>
    %cst_8 = arith.constant 0.707106769 : f32
    %11 = vector.broadcast %cst_8 : f32 to vector<256x128xf32>
    %12 = arith.mulf %8, %11 : vector<256x128xf32>
    %13 = math.erf %12 : vector<256x128xf32>
    %cst_9 = arith.constant 1.000000e+00 : f32
    %14 = vector.broadcast %cst_9 : f32 to vector<256x128xf32>
    %15 = arith.addf %14, %13 : vector<256x128xf32>
    %16 = arith.mulf %10, %15 : vector<256x128xf32>
    %c0_10 = arith.constant 0 : index
    %c0_11 = arith.constant 0 : index
    %17 = vector.load %arg5[%c0_10, %c0_11] : memref<256x128xf32, #tpu.memory_space<vmem>>, vector<256x128xf32>
    tpu.vector_store %arg5[%c0_10, %c0_11], %16 {strides = array<i32>} : memref<256x128xf32, #tpu.memory_space<vmem>>, vector<256x128xf32>,
    return
  }
  func.func @transform_0(%arg0: i32) -> (i32, i32) {
    %c0_i32 = arith.constant 0 : i32
    %c0_i32_0 = arith.constant 0 : i32
    return %arg0, %c0_i32 : i32, i32
  }
  func.func @transform_1(%arg0: i32) -> (i32, i32) {
    %c0_i32 = arith.constant 0 : i32
    %c0_i32_0 = arith.constant 0 : i32
    return %arg0, %c0_i32 : i32, i32
  }
  func.func @transform_2(%arg0: i32) -> (i32, i32) {
    %c0_i32 = arith.constant 0 : i32
    %c0_i32_0 = arith.constant 0 : i32
    %c0_i32_1 = arith.constant 0 : i32
    return %c0_i32, %c0_i32_0 : i32, i32
  }
  func.func @transform_3(%arg0: i32) -> (i32, i32) {
    %c0_i32 = arith.constant 0 : i32
    %c0_i32_0 = arith.constant 0 : i32
    %c0_i32_1 = arith.constant 0 : i32
    return %c0_i32, %c0_i32_0 : i32, i32
  }
  func.func @transform_4(%arg0: i32) -> (i32, i32) {
    %c0_i32 = arith.constant 0 : i32
    %c0_i32_0 = arith.constant 0 : i32
    return %arg0, %c0_i32 : i32, i32
  }
}

</mosaic_0001>

<llo_original>
// kernel: tpu_custom_call.1
$region0: #{tpu_custom_call.1}
  #allocation0 [shape = 'u32[]', space=smem, size = 0x4, offset = 0x4, fixed_abs, tag = 'smem constant byte address 0x4 - core index']
  #allocation1 [shape = 'u32[144,128]{1,0:T(1,128)}', space=vmem, size = 0x12000, scoped, tag = 'internal scratch']
  %s0 = inlined_call_operand.vmem [shape: bf16[512,32], index: 0, kind: input, shape index: {}]
  %s1 = inlined_call_operand.vmem [shape: f32[512,1], index: 1, kind: input, shape index: {}]
  %s2 = inlined_call_operand.vmem [shape: bf16[32,128], index: 2, kind: input, shape index: {}]
  %s3 = inlined_call_operand.vmem [shape: f32[1,128], index: 3, kind: input, shape index: {}]
  %s4 = inlined_call_operand.hbm [shape: f32[512,128], index: 4, kind: output, shape index: {}]
  %s5 = sld [smem:[#allocation0]]
  $region49: #{tpu_custom_call.1} parent=0
    _
  %s7 = ssub.s32 1, %s5
  %s8 = scalar_select 0, %s7, %s5
  $region1: #{tpu_custom_call.1} parent=0
    #allocation2 [shape = 'u8[262144]{0}', space=vmem, size = 0x40000, scoped, tag = 'output window, operand 0']
    #allocation3 [shape = 's32[2]{0}', space=sflag, size = 0x8, scoped, tag = 'scoped memory for tpu_custom_call.1']
    %9 = vsyncpa [#allocation3], 0
    %s10 = scalar_lea.sflag [#allocation3], 1
    %11 = vsyncpa %s10, 0
    loop: start=0, step=1, limit=4
    $region2: #{tpu_custom_call.1} parent=1 // loop_pre_header
      _
    $region3: #{tpu_custom_call.1} parent=1 // loop_header
      %s13 = sphi 0, %s17
      %p14 = scmp.ge.s32.totalorder %s13, 4
      %s23 = sphi 0, %s25
      %s26 = sphi 0, %s23
      %s27 = sphi 0, %s26
      %s43 = sphi 0, %s27
      %s49 = sphi 0, %s51
      %s52 = sphi 0, %s49
      %s53 = sphi 0, %s52
      %s69 = sphi 0, %s53
      %s73 = sphi 0, %s73
      %s75 = sphi 0, %s73
      %s76 = sphi 0, %s75
      %s90 = sphi 0, %s76
      %s94 = sphi 0, %s94
      %s96 = sphi 0, %s94
      %s97 = sphi 0, %s96
      %s111 = sphi 0, %s97
      %s117 = sphi 0, %s119
      %s120 = sphi 0, %s117
      %s121 = sphi 0, %s120
      %s137 = sphi 0, %s121
    $region4: #{tpu_custom_call.1} parent=1 // loop_header_branch
      %16 = sbr.rel (%p14) target = $region8
    $region5: #{tpu_custom_call.1} parent=1 // loop_body
      %s18 = ssub.s32 %s13, 1
      %s19 = ssub.s32 %s13, 2
      %s20 = sadd.s32 %s13, 1
      %s21 = ssub.s32 %s13, %s20
      %p22 = scmp.eq.s32.totalorder %s21, 0
      %s24 = sadd.s32 %s23, 1
      %s25 = scalar_select %p22, %s23, %s24
      %p28 = pneg %p22
      %p29 = scmp.eq.s32.totalorder %s13, 1
      %p30 = por %p28, %p29
      %p31 = scmp.ne.s32.totalorder %s23, %s26
      %p32 = scmp.eq.s32.totalorder %s13, 0
      %p33 = por %p31, %p32
      %p34 = scmp.ne.s32.totalorder %s23, %s26
      %p35 = scmp.eq.s32.totalorder %s18, 1
      %p36 = por %p34, %p35
      %p37 = scmp.ne.s32.totalorder %s26, %s27
      %p38 = scmp.eq.s32.totalorder %s18, 0
      %p39 = por %p37, %p38
      %p40 = scmp.ne.s32.totalorder %s26, %s27
      %p41 = scmp.eq.s32.totalorder %s19, 1
      %p42 = por %p40, %p41
      %p44 = scmp.ne.s32.totalorder %s27, %s43
      %p45 = scmp.eq.s32.totalorder %s19, 0
      %p46 = por %p44, %p45
      %s47 = ssub.s32 %s13, %s20
      %p48 = scmp.eq.s32.totalorder %s47, 0
      %s50 = sadd.s32 %s49, 1
      %s51 = scalar_select %p48, %s49, %s50
      %p54 = pneg %p48
      %p55 = scmp.eq.s32.totalorder %s13, 1
      %p56 = por %p54, %p55
      %p57 = scmp.ne.s32.totalorder %s49, %s52
      %p58 = scmp.eq.s32.totalorder %s13, 0
      %p59 = por %p57, %p58
      %p60 = scmp.ne.s32.totalorder %s49, %s52
      %p61 = scmp.eq.s32.totalorder %s18, 1
      %p62 = por %p60, %p61
      %p63 = scmp.ne.s32.totalorder %s52, %s53
      %p64 = scmp.eq.s32.totalorder %s18, 0
      %p65 = por %p63, %p64
      %p66 = scmp.ne.s32.totalorder %s52, %s53
      %p67 = scmp.eq.s32.totalorder %s19, 1
      %p68 = por %p66, %p67
      %p70 = scmp.ne.s32.totalorder %s53, %s69
      %p71 = scmp.eq.s32.totalorder %s19, 0
      %p72 = por %p70, %p71
      %s74 = sadd.s32 %s73, 1
      %p77 = scmp.eq.s32.totalorder %s13, 1
      %p78 = scmp.ne.s32.totalorder %s73, %s75
      %p79 = scmp.eq.s32.totalorder %s13, 0
      %p80 = por %p78, %p79
      %p81 = scmp.ne.s32.totalorder %s73, %s75
      %p82 = scmp.eq.s32.totalorder %s18, 1
      %p83 = por %p81, %p82
      %p84 = scmp.ne.s32.totalorder %s75, %s76
      %p85 = scmp.eq.s32.totalorder %s18, 0
      %p86 = por %p84, %p85
      %p87 = scmp.ne.s32.totalorder %s75, %s76
      %p88 = scmp.eq.s32.totalorder %s19, 1
      %p89 = por %p87, %p88
      %p91 = scmp.ne.s32.totalorder %s76, %s90
      %p92 = scmp.eq.s32.totalorder %s19, 0
      %p93 = por %p91, %p92
      %s95 = sadd.s32 %s94, 1
      %p98 = scmp.eq.s32.totalorder %s13, 1
      %p99 = scmp.ne.s32.totalorder %s94, %s96
      %p100 = scmp.eq.s32.totalorder %s13, 0
      %p101 = por %p99, %p100
      %p102 = scmp.ne.s32.totalorder %s94, %s96
      %p103 = scmp.eq.s32.totalorder %s18, 1
      %p104 = por %p102, %p103
      %p105 = scmp.ne.s32.totalorder %s96, %s97
      %p106 = scmp.eq.s32.totalorder %s18, 0
      %p107 = por %p105, %p106
      %p108 = scmp.ne.s32.totalorder %s96, %s97
      %p109 = scmp.eq.s32.totalorder %s19, 1
      %p110 = por %p108, %p109
      %p112 = scmp.ne.s32.totalorder %s97, %s111
      %p113 = scmp.eq.s32.totalorder %s19, 0
      %p114 = por %p112, %p113
      %s115 = ssub.s32 %s13, %s20
      %p116 = scmp.eq.s32.totalorder %s115, 0
      %s118 = sadd.s32 %s117, 1
      %s119 = scalar_select %p116, %s117, %s118
      %p122 = pneg %p116
      %p123 = scmp.eq.s32.totalorder %s13, 1
      %p124 = por %p122, %p123
      %p125 = scmp.ne.s32.totalorder %s117, %s120
      %p126 = scmp.eq.s32.totalorder %s13, 0
      %p127 = por %p125, %p126
      %p128 = scmp.ne.s32.totalorder %s117, %s120
      %p129 = scmp.eq.s32.totalorder %s18, 1
      %p130 = por %p128, %p129
      %p131 = scmp.ne.s32.totalorder %s120, %s121
      %p132 = scmp.eq.s32.totalorder %s18, 0
      %p133 = por %p131, %p132
      %p134 = scmp.ne.s32.totalorder %s120, %s121
      %p135 = scmp.eq.s32.totalorder %s19, 1
      %p136 = por %p134, %p135
      %p138 = scmp.ne.s32.totalorder %s121, %s137
      %p139 = scmp.eq.s32.totalorder %s19, 0
      %p140 = por %p138, %p139
      %p141 = scmp.le.s32.totalorder 1, %s13
      %p142 = scmp.lt.s32.totalorder %s13, 3
      %p143 = pnand %p141, %p142
      %p144 = pneg %p143
      // Predicated region
      $region9: #{tpu_custom_call.1} parent=5 // pred_check
        _
      $region10: #{tpu_custom_call.1} parent=5 // pred_check_branch
        %146 = sbr.rel (%p143) target = $region12
      $region11: #{tpu_custom_call.1} parent=5 // pred_region
        %s147 = ssub.s32 %s13, 1
        // Predicated region
        $region13: #{tpu_custom_call.1} parent=11 // pred_check
          %p148 = pneg %p86
        $region14: #{tpu_custom_call.1} parent=11 // pred_check_branch
          %150 = sbr.rel (%p148) target = $region16
        $region15: #{tpu_custom_call.1} parent=11 // pred_region
          _
        $region16: #{tpu_custom_call.1} parent=11 // pred_fallthru
          _
        // Predicated region
        $region17: #{tpu_custom_call.1} parent=11 // pred_check
          %p151 = pneg %p107
        $region18: #{tpu_custom_call.1} parent=11 // pred_check_branch
          %153 = sbr.rel (%p151) target = $region20
        $region19: #{tpu_custom_call.1} parent=11 // pred_region
          _
        $region20: #{tpu_custom_call.1} parent=11 // pred_fallthru
          _
      $region12: #{tpu_custom_call.1} parent=5 // pred_fallthru
        _
      %p154 = scmp.lt.s32.totalorder %s13, 2
      // Predicated region
      $region21: #{tpu_custom_call.1} parent=5 // pred_check
        %p155 = pneg %p154
      $region22: #{tpu_custom_call.1} parent=5 // pred_check_branch
        %157 = sbr.rel (%p155) target = $region24
      $region23: #{tpu_custom_call.1} parent=5 // pred_region
        // Predicated region
        $region25: #{tpu_custom_call.1} parent=23 // pred_check
          %p158 = pneg %p33
        $region26: #{tpu_custom_call.1} parent=23 // pred_check_branch
          %160 = sbr.rel (%p158) target = $region28
        $region27: #{tpu_custom_call.1} parent=23 // pred_region
          %s161 = smul.u32 32, %s13
          %p162 = scmp.lt.s32.totalorder %s161, 63
          %s163 = scalar_select %p162, %s161, 63
          %s164 = smul.addr %s163, 4
          %s165 = scalar_lea.vmem %s0, %s164
          %s166 = smul.u32 32, %s13
        $region28: #{tpu_custom_call.1} parent=23 // pred_fallthru
          _
        // Predicated region
        $region29: #{tpu_custom_call.1} parent=23 // pred_check
          %p167 = pneg %p59
        $region30: #{tpu_custom_call.1} parent=23 // pred_check_branch
          %169 = sbr.rel (%p167) target = $region32
        $region31: #{tpu_custom_call.1} parent=23 // pred_region
          %s170 = smul.u32 32, %s13
          %p171 = scmp.lt.s32.totalorder %s170, 63
          %s172 = scalar_select %p171, %s170, 63
          %s173 = smul.addr %s172, 8
          %s174 = scalar_lea.vmem %s1, %s173
          %s175 = smul.u32 32, %s13
        $region32: #{tpu_custom_call.1} parent=23 // pred_fallthru
          _
      $region24: #{tpu_custom_call.1} parent=5 // pred_fallthru
        _
      %p176 = scmp.le.s32.totalorder 1, %s13
      %p177 = scmp.lt.s32.totalorder %s13, 3
      %p178 = pnand %p176, %p177
      %p179 = pneg %p178
      // Predicated region
      $region33: #{tpu_custom_call.1} parent=5 // pred_check
        _
      $region34: #{tpu_custom_call.1} parent=5 // pred_check_branch
        %181 = sbr.rel (%p178) target = $region36
      $region35: #{tpu_custom_call.1} parent=5 // pred_region
        %s182 = ssub.s32 %s13, 1
        %s183 = smul.u32 32, %s18
        %p184 = scmp.lt.s32.totalorder %s183, 63
        %s185 = scalar_select %p184, %s183, 63
        %s186 = smul.addr %s185, 4
        %s187 = scalar_lea.vmem %s0, %s186
        %p188 = pneg %p39
        %p189 = pneg %p36
        %s190 = smul.u32 32, %s18
        %p191 = scmp.lt.s32.totalorder %s190, 63
        %s192 = scalar_select %p191, %s190, 63
        %s193 = smul.addr %s192, 8
        %s194 = scalar_lea.vmem %s1, %s193
        %p195 = pneg %p65
        %p196 = pneg %p62
        %p197 = pneg %p86
        %p198 = pneg %p83
        %p199 = pneg %p107
        %p200 = pneg %p104
        %p201 = pneg %p133
        %p202 = pneg %p130
        %s203 = sand.u32 %s120, 1
        %s204 = scalar_lea.sflag [#allocation3], %s203
        %s205 = sand.u32 %s120, 1
        %s206 = smul.addr %s205, 256
        %s207 = scalar_lea.vmem [#allocation2], %s206
        %s208 = smul.u32 32, %s18
        %p209 = scmp.lt.s32.totalorder %s208, 63
        %s210 = scalar_select %p209, %s208, 63
        %s211 = smul.addr %s210, 4
        %s212 = scalar_lea.vmem %s0, %s211
        %s213 = smul.u32 32, %s18
        %s214 = smul.u32 32, %s18
        %p215 = scmp.lt.s32.totalorder %s214, 63
        %s216 = scalar_select %p215, %s214, 63
        %s217 = smul.addr %s216, 8
        %s218 = scalar_lea.vmem %s1, %s217
        %s219 = smul.u32 32, %s18
        %s220 = smul.u32 32, %s18
        %v222 = vld [vmem:[%s212] sm:$0xf]
        %v223 = vld [vmem:[%s212 + $0x4] sm:$0xf]
        %v224 = vld [vmem:[%s212 + $0x8] sm:$0xf]
        %v225 = vld [vmem:[%s212 + $0xc] sm:$0xf]
        %v226 = vld [vmem:[%s212 + $0x10] sm:$0xf]
        %v227 = vld [vmem:[%s212 + $0x14] sm:$0xf]
        %v228 = vld [vmem:[%s212 + $0x18] sm:$0xf]
        %v229 = vld [vmem:[%s212 + $0x1c] sm:$0xf]
        %v230 = vld [vmem:[%s212 + $0x20] sm:$0xf]
        %v231 = vld [vmem:[%s212 + $0x24] sm:$0xf]
        %v232 = vld [vmem:[%s212 + $0x28] sm:$0xf]
        %v233 = vld [vmem:[%s212 + $0x2c] sm:$0xf]
        %v234 = vld [vmem:[%s212 + $0x30] sm:$0xf]
        %v235 = vld [vmem:[%s212 + $0x34] sm:$0xf]
        %v236 = vld [vmem:[%s212 + $0x38] sm:$0xf]
        %v237 = vld [vmem:[%s212 + $0x3c] sm:$0xf]
        %v238 = vld [vmem:[%s212 + $0x40] sm:$0xf]
        %v239 = vld [vmem:[%s212 + $0x44] sm:$0xf]
        %v240 = vld [vmem:[%s212 + $0x48] sm:$0xf]
        %v241 = vld [vmem:[%s212 + $0x4c] sm:$0xf]
        %v242 = vld [vmem:[%s212 + $0x50] sm:$0xf]
        %v243 = vld [vmem:[%s212 + $0x54] sm:$0xf]
        %v244 = vld [vmem:[%s212 + $0x58] sm:$0xf]
        %v245 = vld [vmem:[%s212 + $0x5c] sm:$0xf]
        %v246 = vld [vmem:[%s212 + $0x60] sm:$0xf]
        %v247 = vld [vmem:[%s212 + $0x64] sm:$0xf]
        %v248 = vld [vmem:[%s212 + $0x68] sm:$0xf]
        %v249 = vld [vmem:[%s212 + $0x6c] sm:$0xf]
        %v250 = vld [vmem:[%s212 + $0x70] sm:$0xf]
        %v251 = vld [vmem:[%s212 + $0x74] sm:$0xf]
        %v252 = vld [vmem:[%s212 + $0x78] sm:$0xf]
        %v253 = vld [vmem:[%s212 + $0x7c] sm:$0xf]
        %v254 = vld [vmem:[%s2] sm:$0xf]
        %v255 = vld [vmem:[%s2 + $0x4] sm:$0xf]
        %v256 = vld [vmem:[%s2 + $0x8] sm:$0xf]
        %v257 = vld [vmem:[%s2 + $0xc] sm:$0xf]
        %v290 = vunpack.c.l.b16 %v222
        %v291 = vunpack.c.l.b16 %v223
        %v292 = vunpack.c.l.b16 %v224
        %v293 = vunpack.c.l.b16 %v225
        %v294 = vunpack.c.l.b16 %v226
        %v295 = vunpack.c.l.b16 %v227
        %v296 = vunpack.c.l.b16 %v228
        %v297 = vunpack.c.l.b16 %v229
        %v298 = vunpack.c.l.b16 %v230
        %v299 = vunpack.c.l.b16 %v231
        %v300 = vunpack.c.l.b16 %v232
        %v301 = vunpack.c.l.b16 %v233
        %v302 = vunpack.c.l.b16 %v234
        %v303 = vunpack.c.l.b16 %v235
        %v304 = vunpack.c.l.b16 %v236
        %v305 = vunpack.c.l.b16 %v237
        %v306 = vunpack.c.l.b16 %v238
        %v307 = vunpack.c.l.b16 %v239
        %v308 = vunpack.c.l.b16 %v240
        %v309 = vunpack.c.l.b16 %v241
        %v310 = vunpack.c.l.b16 %v242
        %v311 = vunpack.c.l.b16 %v243
        %v312 = vunpack.c.l.b16 %v244
        %v313 = vunpack.c.l.b16 %v245
        %v314 = vunpack.c.l.b16 %v246
        %v315 = vunpack.c.l.b16 %v247
        %v316 = vunpack.c.l.b16 %v248
        %v317 = vunpack.c.l.b16 %v249
        %v318 = vunpack.c.l.b16 %v250
        %v319 = vunpack.c.l.b16 %v251
        %v320 = vunpack.c.l.b16 %v252
        %v321 = vunpack.c.l.b16 %v253
        %v322 = vpack.c.b16 %v291, %v290
        %v323 = vpack.c.b16 %v293, %v292
        %v324 = vpack.c.b16 %v295, %v294
        %v325 = vpack.c.b16 %v297, %v296
        %v326 = vpack.c.b16 %v299, %v298
        %v327 = vpack.c.b16 %v301, %v300
        %v328 = vpack.c.b16 %v303, %v302
        %v329 = vpack.c.b16 %v305, %v304
        %v330 = vpack.c.b16 %v307, %v306
        %v331 = vpack.c.b16 %v309, %v308
        %v332 = vpack.c.b16 %v311, %v310
        %v333 = vpack.c.b16 %v313, %v312
        %v334 = vpack.c.b16 %v315, %v314
        %v335 = vpack.c.b16 %v317, %v316
        %v336 = vpack.c.b16 %v319, %v318
        %v337 = vpack.c.b16 %v321, %v320
        %v342 = vunpack.c.l.b16 %v254
        %v343 = vunpack.c.l.b16 %v255
        %v344 = vunpack.c.l.b16 %v256
        %v345 = vunpack.c.l.b16 %v257
        %v346 = vpack.c.b16 %v343, %v342
        %v347 = vpack.c.b16 %v345, %v344
        %vm350 = vcmask 261120
        %v352 = vsel %vm350, %v322, 0
        %v355 = vsel %vm350, %v323, 0
        %v358 = vsel %vm350, %v324, 0
        %v361 = vsel %vm350, %v325, 0
        %v364 = vsel %vm350, %v326, 0
        %v367 = vsel %vm350, %v327, 0
        %v370 = vsel %vm350, %v328, 0
        %v373 = vsel %vm350, %v329, 0
        %v376 = vsel %vm350, %v330, 0
        %v379 = vsel %vm350, %v331, 0
        %v382 = vsel %vm350, %v332, 0
        %v385 = vsel %vm350, %v333, 0
        %v388 = vsel %vm350, %v334, 0
        %v391 = vsel %vm350, %v335, 0
        %v394 = vsel %vm350, %v336, 0
        %v397 = vsel %vm350, %v337, 0
        %399 = vmatprep.subr.bf16.mxu0 0
        %400 = vmatpush1.bf16.msra.mxu0 %v346
        %401 = vmatprep.subr.bf16.mxu0 0
        %402 = vmatpush1.bf16.msra.mxu0 %v347
        %403 = vmatprep.subr.bf16.mxu0 0
        %404 = vmatpush1.bf16.msra.mxu0 0
        %405 = vmatprep.subr.bf16.mxu0 0
        %406 = vmatpush1.bf16.msra.mxu0 0
        %407 = vmatprep.subr.bf16.mxu0 0
        %408 = vmatpush1.bf16.msra.mxu0 0
        %409 = vmatprep.subr.bf16.mxu0 0
        %410 = vmatpush1.bf16.msra.mxu0 0
        %411 = vmatprep.subr.bf16.mxu0 0
        %412 = vmatpush1.bf16.msra.mxu0 0
        %413 = vmatprep.subr.bf16.mxu0 0
        %414 = vmatpush1.bf16.msra.mxu0 0
        %415 = vmatprep.subr.bf16.mxu0 0
        %416 = vmatpush1.bf16.msra.mxu0 0
        %417 = vmatprep.subr.bf16.mxu0 0
        %418 = vmatpush1.bf16.msra.mxu0 0
        %419 = vmatprep.subr.bf16.mxu0 0
        %420 = vmatpush1.bf16.msra.mxu0 0
        %421 = vmatprep.subr.bf16.mxu0 0
        %422 = vmatpush1.bf16.msra.mxu0 0
        %423 = vmatprep.subr.bf16.mxu0 0
        %424 = vmatpush1.bf16.msra.mxu0 0
        %425 = vmatprep.subr.bf16.mxu0 0
        %426 = vmatpush1.bf16.msra.mxu0 0
        %427 = vmatprep.subr.bf16.mxu0 0
        %428 = vmatpush1.bf16.msra.mxu0 0
        %429 = vmatprep.subr.bf16.mxu0 0
        %430 = vmatpush1.bf16.msra.mxu0 0
        %431 = vmatprep.mubr.bf16.mxu0 0
        %432 = vmatmul.mubr.bf16.gmra.mrb[0].mxu0 %v352
        %v433 = vpop.f32.mrb[0].mxu0
        %v434 = vadd.f32 0.0, %v433
        %v435 = vpop.f32.mrb[0].mxu0
        %v436 = vpop.f32.mrb[0].mxu0
        %v437 = vadd.f32 0.0, %v436
        %v438 = vpop.f32.mrb[0].mxu0
        %439 = vmatprep.mubr.bf16.mxu0 0
        %440 = vmatmul.mubr.bf16.gmra.mrb[0].mxu0 %v355
        %v441 = vpop.f32.mrb[0].mxu0
        %v442 = vadd.f32 0.0, %v441
        %v443 = vpop.f32.mrb[0].mxu0
        %v444 = vpop.f32.mrb[0].mxu0
        %v445 = vadd.f32 0.0, %v444
        %v446 = vpop.f32.mrb[0].mxu0
        %447 = vmatprep.mubr.bf16.mxu0 0
        %448 = vmatmul.mubr.bf16.gmra.mrb[0].mxu0 %v358
        %v449 = vpop.f32.mrb[0].mxu0
        %v450 = vadd.f32 0.0, %v449
        %v451 = vpop.f32.mrb[0].mxu0
        %v452 = vpop.f32.mrb[0].mxu0
        %v453 = vadd.f32 0.0, %v452
        %v454 = vpop.f32.mrb[0].mxu0
        %455 = vmatprep.mubr.bf16.mxu0 0
        %456 = vmatmul.mubr.bf16.gmra.mrb[0].mxu0 %v361
        %v457 = vpop.f32.mrb[0].mxu0
        %v458 = vadd.f32 0.0, %v457
        %v459 = vpop.f32.mrb[0].mxu0
        %v460 = vpop.f32.mrb[0].mxu0
        %v461 = vadd.f32 0.0, %v460
        %v462 = vpop.f32.mrb[0].mxu0
        %463 = vmatprep.mubr.bf16.mxu0 0
        %464 = vmatmul.mubr.bf16.gmra.mrb[0].mxu0 %v364
        %v465 = vpop.f32.mrb[0].mxu0
        %v466 = vadd.f32 0.0, %v465
        %v467 = vpop.f32.mrb[0].mxu0
        %v468 = vpop.f32.mrb[0].mxu0
        %v469 = vadd.f32 0.0, %v468
        %v470 = vpop.f32.mrb[0].mxu0
        %471 = vmatprep.mubr.bf16.mxu0 0
        %472 = vmatmul.mubr.bf16.gmra.mrb[0].mxu0 %v367
        %v473 = vpop.f32.mrb[0].mxu0
        %v474 = vadd.f32 0.0, %v473
        %v475 = vpop.f32.mrb[0].mxu0
        %v476 = vpop.f32.mrb[0].mxu0
        %v477 = vadd.f32 0.0, %v476
        %v478 = vpop.f32.mrb[0].mxu0
        %479 = vmatprep.mubr.bf16.mxu0 0
        %480 = vmatmul.mubr.bf16.gmra.mrb[0].mxu0 %v370
        %v481 = vpop.f32.mrb[0].mxu0
        %v482 = vadd.f32 0.0, %v481
        %v483 = vpop.f32.mrb[0].mxu0
        %v484 = vpop.f32.mrb[0].mxu0
        %v485 = vadd.f32 0.0, %v484
        %v486 = vpop.f32.mrb[0].mxu0
        %487 = vmatprep.mubr.bf16.mxu0 0
        %488 = vmatmul.mubr.bf16.gmra.mrb[0].mxu0 %v373
        %v489 = vpop.f32.mrb[0].mxu0
        %v490 = vadd.f32 0.0, %v489
        %v491 = vpop.f32.mrb[0].mxu0
        %v492 = vpop.f32.mrb[0].mxu0
        %v493 = vadd.f32 0.0, %v492
        %v494 = vpop.f32.mrb[0].mxu0
        %495 = vmatprep.mubr.bf16.mxu0 0
        %496 = vmatmul.mubr.bf16.gmra.mrb[0].mxu0 %v376
        %v497 = vpop.f32.mrb[0].mxu0
        %v498 = vadd.f32 0.0, %v497
        %v499 = vpop.f32.mrb[0].mxu0
        %v500 = vpop.f32.mrb[0].mxu0
        %v501 = vadd.f32 0.0, %v500
        %v502 = vpop.f32.mrb[0].mxu0
        %503 = vmatprep.mubr.bf16.mxu0 0
        %504 = vmatmul.mubr.bf16.gmra.mrb[0].mxu0 %v379
        %v505 = vpop.f32.mrb[0].mxu0
        %v506 = vadd.f32 0.0, %v505
        %v507 = vpop.f32.mrb[0].mxu0
        %v508 = vpop.f32.mrb[0].mxu0
        %v509 = vadd.f32 0.0, %v508
        %v510 = vpop.f32.mrb[0].mxu0
        %511 = vmatprep.mubr.bf16.mxu0 0
        %512 = vmatmul.mubr.bf16.gmra.mrb[0].mxu0 %v382
        %v513 = vpop.f32.mrb[0].mxu0
        %v514 = vadd.f32 0.0, %v513
        %v515 = vpop.f32.mrb[0].mxu0
        %v516 = vpop.f32.mrb[0].mxu0
        %v517 = vadd.f32 0.0, %v516
        %v518 = vpop.f32.mrb[0].mxu0
        %519 = vmatprep.mubr.bf16.mxu0 0
        %520 = vmatmul.mubr.bf16.gmra.mrb[0].mxu0 %v385
        %v521 = vpop.f32.mrb[0].mxu0
        %v522 = vadd.f32 0.0, %v521
        %v523 = vpop.f32.mrb[0].mxu0
        %v524 = vpop.f32.mrb[0].mxu0
        %v525 = vadd.f32 0.0, %v524
        %v526 = vpop.f32.mrb[0].mxu0
        %527 = vmatprep.mubr.bf16.mxu0 0
        %528 = vmatmul.mubr.bf16.gmra.mrb[0].mxu0 %v388
        %v529 = vpop.f32.mrb[0].mxu0
        %v530 = vadd.f32 0.0, %v529
        %v531 = vpop.f32.mrb[0].mxu0
        %v532 = vpop.f32.mrb[0].mxu0
        %v533 = vadd.f32 0.0, %v532
        %v534 = vpop.f32.mrb[0].mxu0
        %535 = vmatprep.mubr.bf16.mxu0 0
        %536 = vmatmul.mubr.bf16.gmra.mrb[0].mxu0 %v391
        %v537 = vpop.f32.mrb[0].mxu0
        %v538 = vadd.f32 0.0, %v537
        %v539 = vpop.f32.mrb[0].mxu0
        %v540 = vpop.f32.mrb[0].mxu0
        %v541 = vadd.f32 0.0, %v540
        %v542 = vpop.f32.mrb[0].mxu0
        %543 = vmatprep.mubr.bf16.mxu0 0
        %544 = vmatmul.mubr.bf16.gmra.mrb[0].mxu0 %v394
        %v545 = vpop.f32.mrb[0].mxu0
        %v546 = vadd.f32 0.0, %v545
        %v547 = vpop.f32.mrb[0].mxu0
        %v548 = vpop.f32.mrb[0].mxu0
        %v549 = vadd.f32 0.0, %v548
        %v550 = vpop.f32.mrb[0].mxu0
        %551 = vmatprep.mubr.bf16.mxu0 0
        %552 = vmatmul.mubr.bf16.gmra.mrb[0].mxu0 %v397
        %v553 = vpop.f32.mrb[0].mxu0
        %v554 = vadd.f32 0.0, %v553
        %v555 = vpop.f32.mrb[0].mxu0
        %v556 = vpop.f32.mrb[0].mxu0
        %v557 = vadd.f32 0.0, %v556
        %v558 = vpop.f32.mrb[0].mxu0
        %559 = vdwg.mxu0
        %v560 = vld [vmem:[%s218] sm:$0xff]
        %v561 = vld [vmem:[%s218 + $0x8] sm:$0xff]
        %v562 = vld [vmem:[%s218 + $0x10] sm:$0xff]
        %v563 = vld [vmem:[%s218 + $0x18] sm:$0xff]
        %v564 = vld [vmem:[%s218 + $0x20] sm:$0xff]
        %v565 = vld [vmem:[%s218 + $0x28] sm:$0xff]
        %v566 = vld [vmem:[%s218 + $0x30] sm:$0xff]
        %v567 = vld [vmem:[%s218 + $0x38] sm:$0xff]
        %v568 = vld [vmem:[%s218 + $0x40] sm:$0xff]
        %v569 = vld [vmem:[%s218 + $0x48] sm:$0xff]
        %v570 = vld [vmem:[%s218 + $0x50] sm:$0xff]
        %v571 = vld [vmem:[%s218 + $0x58] sm:$0xff]
        %v572 = vld [vmem:[%s218 + $0x60] sm:$0xff]
        %v573 = vld [vmem:[%s218 + $0x68] sm:$0xff]
        %v574 = vld [vmem:[%s218 + $0x70] sm:$0xff]
        %v575 = vld [vmem:[%s218 + $0x78] sm:$0xff]
        %v576 = vld [vmem:[%s218 + $0x80] sm:$0xff]
        %v577 = vld [vmem:[%s218 + $0x88] sm:$0xff]
        %v578 = vld [vmem:[%s218 + $0x90] sm:$0xff]
        %v579 = vld [vmem:[%s218 + $0x98] sm:$0xff]
        %v580 = vld [vmem:[%s218 + $0xa0] sm:$0xff]
        %v581 = vld [vmem:[%s218 + $0xa8] sm:$0xff]
        %v582 = vld [vmem:[%s218 + $0xb0] sm:$0xff]
        %v583 = vld [vmem:[%s218 + $0xb8] sm:$0xff]
        %v584 = vld [vmem:[%s218 + $0xc0] sm:$0xff]
        %v585 = vld [vmem:[%s218 + $0xc8] sm:$0xff]
        %v586 = vld [vmem:[%s218 + $0xd0] sm:$0xff]
        %v587 = vld [vmem:[%s218 + $0xd8] sm:$0xff]
        %v588 = vld [vmem:[%s218 + $0xe0] sm:$0xff]
        %v589 = vld [vmem:[%s218 + $0xe8] sm:$0xff]
        %v590 = vld [vmem:[%s218 + $0xf0] sm:$0xff]
        %v591 = vld [vmem:[%s218 + $0xf8] sm:$0xff]
        %593 = vset.pattern.permute.xlu0 0
        %594 = vperm.xlu0 %593, %v560
        %v595 = vpop.permute.xlu0 %594
        %598 = vset.pattern.permute.xlu0 0
        %599 = vperm.xlu0 %598, %v561
        %v600 = vpop.permute.xlu0 %599
        %603 = vset.pattern.permute.xlu0 0
        %604 = vperm.xlu0 %603, %v562
        %v605 = vpop.permute.xlu0 %604
        %608 = vset.pattern.permute.xlu0 0
        %609 = vperm.xlu0 %608, %v563
        %v610 = vpop.permute.xlu0 %609
        %613 = vset.pattern.permute.xlu0 0
        %614 = vperm.xlu0 %613, %v564
        %v615 = vpop.permute.xlu0 %614
        %618 = vset.pattern.permute.xlu0 0
        %619 = vperm.xlu0 %618, %v565
        %v620 = vpop.permute.xlu0 %619
        %623 = vset.pattern.permute.xlu0 0
        %624 = vperm.xlu0 %623, %v566
        %v625 = vpop.permute.xlu0 %624
        %628 = vset.pattern.permute.xlu0 0
        %629 = vperm.xlu0 %628, %v567
        %v630 = vpop.permute.xlu0 %629
        %633 = vset.pattern.permute.xlu0 0
        %634 = vperm.xlu0 %633, %v568
        %v635 = vpop.permute.xlu0 %634
        %638 = vset.pattern.permute.xlu0 0
        %639 = vperm.xlu0 %638, %v569
        %v640 = vpop.permute.xlu0 %639
        %643 = vset.pattern.permute.xlu0 0
        %644 = vperm.xlu0 %643, %v570
        %v645 = vpop.permute.xlu0 %644
        %648 = vset.pattern.permute.xlu0 0
        %649 = vperm.xlu0 %648, %v571
        %v650 = vpop.permute.xlu0 %649
        %653 = vset.pattern.permute.xlu0 0
        %654 = vperm.xlu0 %653, %v572
        %v655 = vpop.permute.xlu0 %654
        %658 = vset.pattern.permute.xlu0 0
        %659 = vperm.xlu0 %658, %v573
        %v660 = vpop.permute.xlu0 %659
        %663 = vset.pattern.permute.xlu0 0
        %664 = vperm.xlu0 %663, %v574
        %v665 = vpop.permute.xlu0 %664
        %668 = vset.pattern.permute.xlu0 0
        %669 = vperm.xlu0 %668, %v575
        %v670 = vpop.permute.xlu0 %669
        %673 = vset.pattern.permute.xlu0 0
        %674 = vperm.xlu0 %673, %v576
        %v675 = vpop.permute.xlu0 %674
        %678 = vset.pattern.permute.xlu0 0
        %679 = vperm.xlu0 %678, %v577
        %v680 = vpop.permute.xlu0 %679
        %683 = vset.pattern.permute.xlu0 0
        %684 = vperm.xlu0 %683, %v578
        %v685 = vpop.permute.xlu0 %684
        %688 = vset.pattern.permute.xlu0 0
        %689 = vperm.xlu0 %688, %v579
        %v690 = vpop.permute.xlu0 %689
        %693 = vset.pattern.permute.xlu0 0
        %694 = vperm.xlu0 %693, %v580
        %v695 = vpop.permute.xlu0 %694
        %698 = vset.pattern.permute.xlu0 0
        %699 = vperm.xlu0 %698, %v581
        %v700 = vpop.permute.xlu0 %699
        %703 = vset.pattern.permute.xlu0 0
        %704 = vperm.xlu0 %703, %v582
        %v705 = vpop.permute.xlu0 %704
        %708 = vset.pattern.permute.xlu0 0
        %709 = vperm.xlu0 %708, %v583
        %v710 = vpop.permute.xlu0 %709
        %713 = vset.pattern.permute.xlu0 0
        %714 = vperm.xlu0 %713, %v584
        %v715 = vpop.permute.xlu0 %714
        %718 = vset.pattern.permute.xlu0 0
        %719 = vperm.xlu0 %718, %v585
        %v720 = vpop.permute.xlu0 %719
        %723 = vset.pattern.permute.xlu0 0
        %724 = vperm.xlu0 %723, %v586
        %v725 = vpop.permute.xlu0 %724
        %728 = vset.pattern.permute.xlu0 0
        %729 = vperm.xlu0 %728, %v587
        %v730 = vpop.permute.xlu0 %729
        %733 = vset.pattern.permute.xlu0 0
        %734 = vperm.xlu0 %733, %v588
        %v735 = vpop.permute.xlu0 %734
        %738 = vset.pattern.permute.xlu0 0
        %739 = vperm.xlu0 %738, %v589
        %v740 = vpop.permute.xlu0 %739
        %743 = vset.pattern.permute.xlu0 0
        %744 = vperm.xlu0 %743, %v590
        %v745 = vpop.permute.xlu0 %744
        %748 = vset.pattern.permute.xlu0 0
        %749 = vperm.xlu0 %748, %v591
        %v750 = vpop.permute.xlu0 %749
        %v752 = vmul.f32 %v434, %v595
        %v753 = vmul.f32 %v437, %v600
        %v754 = vmul.f32 %v442, %v605
        %v755 = vmul.f32 %v445, %v610
        %v756 = vmul.f32 %v450, %v615
        %v757 = vmul.f32 %v453, %v620
        %v758 = vmul.f32 %v458, %v625
        %v759 = vmul.f32 %v461, %v630
        %v760 = vmul.f32 %v466, %v635
        %v761 = vmul.f32 %v469, %v640
        %v762 = vmul.f32 %v474, %v645
        %v763 = vmul.f32 %v477, %v650
        %v764 = vmul.f32 %v482, %v655
        %v765 = vmul.f32 %v485, %v660
        %v766 = vmul.f32 %v490, %v665
        %v767 = vmul.f32 %v493, %v670
        %v768 = vmul.f32 %v498, %v675
        %v769 = vmul.f32 %v501, %v680
        %v770 = vmul.f32 %v506, %v685
        %v771 = vmul.f32 %v509, %v690
        %v772 = vmul.f32 %v514, %v695
        %v773 = vmul.f32 %v517, %v700
        %v774 = vmul.f32 %v522, %v705
        %v775 = vmul.f32 %v525, %v710
        %v776 = vmul.f32 %v530, %v715
        %v777 = vmul.f32 %v533, %v720
        %v778 = vmul.f32 %v538, %v725
        %v779 = vmul.f32 %v541, %v730
        %v780 = vmul.f32 %v546, %v735
        %v781 = vmul.f32 %v549, %v740
        %v782 = vmul.f32 %v554, %v745
        %v783 = vmul.f32 %v557, %v750
        %v784 = vld [vmem:[%s3] sm:$0x1]
        %v786 = vlaneseq
        %v787 = vshrl.u32 %v786, 7
        %v788 = vsub.s32 0, %v787
        %v789 = vrot.slane %v784, %v788
        %v791 = vadd.f32 %v752, %v789
        %v792 = vadd.f32 %v753, %v789
        %v793 = vadd.f32 %v754, %v789
        %v794 = vadd.f32 %v755, %v789
        %v795 = vadd.f32 %v756, %v789
        %v796 = vadd.f32 %v757, %v789
        %v797 = vadd.f32 %v758, %v789
        %v798 = vadd.f32 %v759, %v789
        %v799 = vadd.f32 %v760, %v789
        %v800 = vadd.f32 %v761, %v789
        %v801 = vadd.f32 %v762, %v789
        %v802 = vadd.f32 %v763, %v789
        %v803 = vadd.f32 %v764, %v789
        %v804 = vadd.f32 %v765, %v789
        %v805 = vadd.f32 %v766, %v789
        %v806 = vadd.f32 %v767, %v789
        %v807 = vadd.f32 %v768, %v789
        %v808 = vadd.f32 %v769, %v789
        %v809 = vadd.f32 %v770, %v789
        %v810 = vadd.f32 %v771, %v789
        %v811 = vadd.f32 %v772, %v789
        %v812 = vadd.f32 %v773, %v789
        %v813 = vadd.f32 %v774, %v789
        %v814 = vadd.f32 %v775, %v789
        %v815 = vadd.f32 %v776, %v789
        %v816 = vadd.f32 %v777, %v789
        %v817 = vadd.f32 %v778, %v789
        %v818 = vadd.f32 %v779, %v789
        %v819 = vadd.f32 %v780, %v789
        %v820 = vadd.f32 %v781, %v789
        %v821 = vadd.f32 %v782, %v789
        %v822 = vadd.f32 %v783, %v789
        %v823 = vmul.f32 %v791, 0.5
        %v824 = vmul.f32 %v792, 0.5
        %v825 = vmul.f32 %v793, 0.5
        %v826 = vmul.f32 %v794, 0.5
        %v827 = vmul.f32 %v795, 0.5
        %v828 = vmul.f32 %v796, 0.5
        %v829 = vmul.f32 %v797, 0.5
        %v830 = vmul.f32 %v798, 0.5
        %v831 = vmul.f32 %v799, 0.5
        %v832 = vmul.f32 %v800, 0.5
        %v833 = vmul.f32 %v801, 0.5
        %v834 = vmul.f32 %v802, 0.5
        %v835 = vmul.f32 %v803, 0.5
        %v836 = vmul.f32 %v804, 0.5
        %v837 = vmul.f32 %v805, 0.5
        %v838 = vmul.f32 %v806, 0.5
        %v839 = vmul.f32 %v807, 0.5
        %v840 = vmul.f32 %v808, 0.5
        %v841 = vmul.f32 %v809, 0.5
        %v842 = vmul.f32 %v810, 0.5
        %v843 = vmul.f32 %v811, 0.5
        %v844 = vmul.f32 %v812, 0.5
        %v845 = vmul.f32 %v813, 0.5
        %v846 = vmul.f32 %v814, 0.5
        %v847 = vmul.f32 %v815, 0.5
        %v848 = vmul.f32 %v816, 0.5
        %v849 = vmul.f32 %v817, 0.5
        %v850 = vmul.f32 %v818, 0.5
        %v851 = vmul.f32 %v819, 0.5
        %v852 = vmul.f32 %v820, 0.5
        %v853 = vmul.f32 %v821, 0.5
        %v854 = vmul.f32 %v822, 0.5
        %v855 = vmul.f32 %v791, 0.70710677
        %v856 = vmul.f32 %v792, 0.70710677
        %v857 = vmul.f32 %v793, 0.70710677
        %v858 = vmul.f32 %v794, 0.70710677
        %v859 = vmul.f32 %v795, 0.70710677
        %v860 = vmul.f32 %v796, 0.70710677
        %v861 = vmul.f32 %v797, 0.70710677
        %v862 = vmul.f32 %v798, 0.70710677
        %v863 = vmul.f32 %v799, 0.70710677
        %v864 = vmul.f32 %v800, 0.70710677
        %v865 = vmul.f32 %v801, 0.70710677
        %v866 = vmul.f32 %v802, 0.70710677
        %v867 = vmul.f32 %v803, 0.70710677
        %v868 = vmul.f32 %v804, 0.70710677
        %v869 = vmul.f32 %v805, 0.70710677
        %v870 = vmul.f32 %v806, 0.70710677
        %v871 = vmul.f32 %v807, 0.70710677
        %v872 = vmul.f32 %v808, 0.70710677
        %v873 = vmul.f32 %v809, 0.70710677
        %v874 = vmul.f32 %v810, 0.70710677
        %v875 = vmul.f32 %v811, 0.70710677
        %v876 = vmul.f32 %v812, 0.70710677
        %v877 = vmul.f32 %v813, 0.70710677
        %v878 = vmul.f32 %v814, 0.70710677
        %v879 = vmul.f32 %v815, 0.70710677
        %v880 = vmul.f32 %v816, 0.70710677
        %v881 = vmul.f32 %v817, 0.70710677
        %v882 = vmul.f32 %v818, 0.70710677
        %v883 = vmul.f32 %v819, 0.70710677
        %v884 = vmul.f32 %v820, 0.70710677
        %v885 = vmul.f32 %v821, 0.70710677
        %v886 = vmul.f32 %v822, 0.70710677
        %v887 = verf.f32.pop %v855
        %v888 = verf.f32.pop %v856
        %v889 = verf.f32.pop %v857
        %v890 = verf.f32.pop %v858
        %v891 = verf.f32.pop %v859
        %v892 = verf.f32.pop %v860
        %v893 = verf.f32.pop %v861
        %v894 = verf.f32.pop %v862
        %v895 = verf.f32.pop %v863
        %v896 = verf.f32.pop %v864
        %v897 = verf.f32.pop %v865
        %v898 = verf.f32.pop %v866
        %v899 = verf.f32.pop %v867
        %v900 = verf.f32.pop %v868
        %v901 = verf.f32.pop %v869
        %v902 = verf.f32.pop %v870
        %v903 = verf.f32.pop %v871
        %v904 = verf.f32.pop %v872
        %v905 = verf.f32.pop %v873
        %v906 = verf.f32.pop %v874
        %v907 = verf.f32.pop %v875
        %v908 = verf.f32.pop %v876
        %v909 = verf.f32.pop %v877
        %v910 = verf.f32.pop %v878
        %v911 = verf.f32.pop %v879
        %v912 = verf.f32.pop %v880
        %v913 = verf.f32.pop %v881
        %v914 = verf.f32.pop %v882
        %v915 = verf.f32.pop %v883
        %v916 = verf.f32.pop %v884
        %v917 = verf.f32.pop %v885
        %v918 = verf.f32.pop %v886
        %v919 = vadd.f32 %v887, 1.0
        %v920 = vadd.f32 %v888, 1.0
        %v921 = vadd.f32 %v889, 1.0
        %v922 = vadd.f32 %v890, 1.0
        %v923 = vadd.f32 %v891, 1.0
        %v924 = vadd.f32 %v892, 1.0
        %v925 = vadd.f32 %v893, 1.0
        %v926 = vadd.f32 %v894, 1.0
        %v927 = vadd.f32 %v895, 1.0
        %v928 = vadd.f32 %v896, 1.0
        %v929 = vadd.f32 %v897, 1.0
        %v930 = vadd.f32 %v898, 1.0
        %v931 = vadd.f32 %v899, 1.0
        %v932 = vadd.f32 %v900, 1.0
        %v933 = vadd.f32 %v901, 1.0
        %v934 = vadd.f32 %v902, 1.0
        %v935 = vadd.f32 %v903, 1.0
        %v936 = vadd.f32 %v904, 1.0
        %v937 = vadd.f32 %v905, 1.0
        %v938 = vadd.f32 %v906, 1.0
        %v939 = vadd.f32 %v907, 1.0
        %v940 = vadd.f32 %v908, 1.0
        %v941 = vadd.f32 %v909, 1.0
        %v942 = vadd.f32 %v910, 1.0
        %v943 = vadd.f32 %v911, 1.0
        %v944 = vadd.f32 %v912, 1.0
        %v945 = vadd.f32 %v913, 1.0
        %v946 = vadd.f32 %v914, 1.0
        %v947 = vadd.f32 %v915, 1.0
        %v948 = vadd.f32 %v916, 1.0
        %v949 = vadd.f32 %v917, 1.0
        %v950 = vadd.f32 %v918, 1.0
        %v951 = vmul.f32 %v823, %v919
        %v952 = vmul.f32 %v824, %v920
        %v953 = vmul.f32 %v825, %v921
        %v954 = vmul.f32 %v826, %v922
        %v955 = vmul.f32 %v827, %v923
        %v956 = vmul.f32 %v828, %v924
        %v957 = vmul.f32 %v829, %v925
        %v958 = vmul.f32 %v830, %v926
        %v959 = vmul.f32 %v831, %v927
        %v960 = vmul.f32 %v832, %v928
        %v961 = vmul.f32 %v833, %v929
        %v962 = vmul.f32 %v834, %v930
        %v963 = vmul.f32 %v835, %v931
        %v964 = vmul.f32 %v836, %v932
        %v965 = vmul.f32 %v837, %v933
        %v966 = vmul.f32 %v838, %v934
        %v967 = vmul.f32 %v839, %v935
        %v968 = vmul.f32 %v840, %v936
        %v969 = vmul.f32 %v841, %v937
        %v970 = vmul.f32 %v842, %v938
        %v971 = vmul.f32 %v843, %v939
        %v972 = vmul.f32 %v844, %v940
        %v973 = vmul.f32 %v845, %v941
        %v974 = vmul.f32 %v846, %v942
        %v975 = vmul.f32 %v847, %v943
        %v976 = vmul.f32 %v848, %v944
        %v977 = vmul.f32 %v849, %v945
        %v978 = vmul.f32 %v850, %v946
        %v979 = vmul.f32 %v851, %v947
        %v980 = vmul.f32 %v852, %v948
        %v981 = vmul.f32 %v853, %v949
        %v982 = vmul.f32 %v854, %v950
        %983 = vst [vmem:[%s207] sm:$0xff] %v951
        %984 = vst [vmem:[%s207 + $0x8] sm:$0xff] %v952
        %985 = vst [vmem:[%s207 + $0x10] sm:$0xff] %v953
        %986 = vst [vmem:[%s207 + $0x18] sm:$0xff] %v954
        %987 = vst [vmem:[%s207 + $0x20] sm:$0xff] %v955
        %988 = vst [vmem:[%s207 + $0x28] sm:$0xff] %v956
        %989 = vst [vmem:[%s207 + $0x30] sm:$0xff] %v957
        %990 = vst [vmem:[%s207 + $0x38] sm:$0xff] %v958
        %991 = vst [vmem:[%s207 + $0x40] sm:$0xff] %v959
        %992 = vst [vmem:[%s207 + $0x48] sm:$0xff] %v960
        %993 = vst [vmem:[%s207 + $0x50] sm:$0xff] %v961
        %994 = vst [vmem:[%s207 + $0x58] sm:$0xff] %v962
        %995 = vst [vmem:[%s207 + $0x60] sm:$0xff] %v963
        %996 = vst [vmem:[%s207 + $0x68] sm:$0xff] %v964
        %997 = vst [vmem:[%s207 + $0x70] sm:$0xff] %v965
        %998 = vst [vmem:[%s207 + $0x78] sm:$0xff] %v966
        %999 = vst [vmem:[%s207 + $0x80] sm:$0xff] %v967
        %1000 = vst [vmem:[%s207 + $0x88] sm:$0xff] %v968
        %1001 = vst [vmem:[%s207 + $0x90] sm:$0xff] %v969
        %1002 = vst [vmem:[%s207 + $0x98] sm:$0xff] %v970
        %1003 = vst [vmem:[%s207 + $0xa0] sm:$0xff] %v971
        %1004 = vst [vmem:[%s207 + $0xa8] sm:$0xff] %v972
        %1005 = vst [vmem:[%s207 + $0xb0] sm:$0xff] %v973
        %1006 = vst [vmem:[%s207 + $0xb8] sm:$0xff] %v974
        %1007 = vst [vmem:[%s207 + $0xc0] sm:$0xff] %v975
        %1008 = vst [vmem:[%s207 + $0xc8] sm:$0xff] %v976
        %1009 = vst [vmem:[%s207 + $0xd0] sm:$0xff] %v977
        %1010 = vst [vmem:[%s207 + $0xd8] sm:$0xff] %v978
        %1011 = vst [vmem:[%s207 + $0xe0] sm:$0xff] %v979
        %1012 = vst [vmem:[%s207 + $0xe8] sm:$0xff] %v980
        %1013 = vst [vmem:[%s207 + $0xf0] sm:$0xff] %v981
        %1014 = vst [vmem:[%s207 + $0xf8] sm:$0xff] %v982
        %s1015 = sand.u32 %s120, 1
        %s1016 = scalar_lea.sflag [#allocation3], %s1015
        %s1017 = sand.u32 %s120, 1
        %s1018 = smul.addr %s1017, 256
        %s1019 = scalar_lea.vmem [#allocation2], %s1018
        // Predicated region
        $region37: #{tpu_custom_call.1} parent=35 // pred_check
          %p1020 = pneg %p130
        $region38: #{tpu_custom_call.1} parent=35 // pred_check_branch
          %1022 = sbr.rel (%p1020) target = $region40
        $region39: #{tpu_custom_call.1} parent=35 // pred_region
          %s1023 = smul.u32 32, %s18
          %s1025 = ssub.s32 4096, 4096
          %1026 = vsyncadd %s1016, %s1025
          %s1027 = smul.addr %s1023, 128
          %s1028 = scalar_lea.hbm %s4, %s1027
          %s1029 = sshll.u32 %s1019, 4
          %s1030 = int_to_ptr.vmem [resolvable:$true] %s1029
          %1035 = dma.vmem_to_hbm [thread:$0]  %s1030, 4096, %s1028, %s1016, 128, 128, 8
        $region40: #{tpu_custom_call.1} parent=35 // pred_fallthru
          _
      $region36: #{tpu_custom_call.1} parent=5 // pred_fallthru
        _
      %p1036 = scmp.le.s32.totalorder 2, %s13
      // Predicated region
      $region41: #{tpu_custom_call.1} parent=5 // pred_check
        %p1037 = pneg %p1036
      $region42: #{tpu_custom_call.1} parent=5 // pred_check_branch
        %1039 = sbr.rel (%p1037) target = $region44
      $region43: #{tpu_custom_call.1} parent=5 // pred_region
        %s1040 = ssub.s32 %s13, 2
        // Predicated region
        $region45: #{tpu_custom_call.1} parent=43 // pred_check
          %p1041 = pneg %p136
        $region46: #{tpu_custom_call.1} parent=43 // pred_check_branch
          %1043 = sbr.rel (%p1041) target = $region48
        $region47: #{tpu_custom_call.1} parent=43 // pred_region
          %s1044 = sand.u32 %s121, 1
          %s1045 = scalar_lea.sflag [#allocation3], %s1044
          %s1046 = sand.u32 %s121, 1
          %s1047 = smul.addr %s1046, 256
          %s1048 = scalar_lea.vmem [#allocation2], %s1047
          %1049 = dma.done %s1045, 4096
        $region48: #{tpu_custom_call.1} parent=43 // pred_fallthru
          _
      $region44: #{tpu_custom_call.1} parent=5 // pred_fallthru
        _
    $region6: #{tpu_custom_call.1} parent=1 // loop_footer
      %s17 = sadd.s32 1, %s13
    $region7: #{tpu_custom_call.1} parent=1 // loop_footer_branch
      %12 = sbr.rel target = $region3
    $region8: #{tpu_custom_call.1} parent=1 // loop_exit
      _
    %1050 = vsyncpa [#allocation3], 1
    %s1051 = scalar_lea.sflag [#allocation3], 1
    %1052 = vsyncpa %s1051, 1

</llo_original>
